<compile_context>
chip_gen: v6e
topology: v6e:2x2x1
jax: 0.10.0
libtpu: 0.0.40
codegen_flags: <defaults>
</compile_context>

<pallas_src>
import functools

import jax
import jax.numpy as jnp
from jax import lax
from jax.experimental import pallas as pl
from jax.experimental.pallas import tpu as pltpu


def _round_up(a, b):
    return ((a + b - 1) // b) * b


def _zdecoder_kernel(x_ref, w1_ref, b1_ref, w2_ref, b2_ref, w3_ref, b3_ref,
                     o_ref):
    """One (TILE_M, x_dim) row-tile of the fused 3-layer MLP."""
    w_dtype = w1_ref.dtype
    x = x_ref[...].astype(w_dtype)                       # (tm, x_dim)

    # Contract the last axis of both operands (A @ B^T): PyTorch (out, in)
    # weights are used directly, accumulation in f32 on the MXU.
    dn = (((1,), (1,)), ((), ()))

    # Layer 1: (tm, x_dim) @ (hidden, x_dim)^T -> (tm, hidden)
    h = lax.dot_general(x, w1_ref[...], dn, preferred_element_type=jnp.float32)
    h = jnp.maximum(h + b1_ref[...], 0.0)                # ReLU; Dropout == id

    # Layer 2: (tm, hidden) @ (hidden, hidden)^T -> (tm, hidden)
    h = lax.dot_general(h.astype(w_dtype), w2_ref[...], dn,
                        preferred_element_type=jnp.float32)
    h = jnp.maximum(h + b2_ref[...], 0.0)                # ReLU; Dropout == id

    # Layer 3 (no activation): (tm, hidden) @ (z_dim, hidden)^T -> (tm, z_dim)
    out = lax.dot_general(h.astype(w_dtype), w3_ref[...], dn,
                          preferred_element_type=jnp.float32)
    o_ref[...] = (out + b3_ref[...]).astype(o_ref.dtype)


@functools.partial(jax.jit, static_argnames=("tile_m",))
def zdecoder_forward(x, params, *, tile_m=4096):
    """x: (..., x_dim) -> (..., z_dim).  Weights in PyTorch (out, in) layout."""
    w1, b1, w2, b2, w3, b3 = params
    x_dim = x.shape[-1]
    hidden = w1.shape[0]
    z_dim = w3.shape[0]
    lead = x.shape[:-1]
    m = 1
    for d in lead:
        m *= d
    m = max(m, 1)

    x2 = x.reshape(m, x_dim)          # view-only flatten; no extra HBM pass

    # Row tile: multiple of 128, clamped so moderate m still gets >=2 grid
    # steps (both v7x TensorCores via the "parallel" axis).
    tm = max(128, min(tile_m, _round_up(pl.cdiv(m, 2), 128)))
    grid = (pl.cdiv(m, tm),)          # partial last block handled by Pallas

    # Biases as f32 rows; broadcast over the tile's row dim inside the kernel.
    b1r = b1.astype(jnp.float32).reshape(1, hidden)
    b2r = b2.astype(jnp.float32).reshape(1, hidden)
    b3r = b3.astype(jnp.float32).reshape(1, z_dim)

    resident = lambda shape: pl.BlockSpec(shape, lambda i: (0, 0))

    # Conservative VMEM budget (VMEM tiles are lane-padded to 128 lanes).
    it = x.dtype.itemsize
    lane_pad = lambda rows, cols, isz: rows * _round_up(cols, 128) * isz
    weight_bytes = sum(int(a.size) * a.dtype.itemsize for a in (w1, w2, w3))
    bias_bytes = (2 * hidden + z_dim) * 4
    vmem_bytes = int(
        2 * lane_pad(tm, x_dim, it)        # double-buffered input tile
        + 2 * lane_pad(tm, z_dim, it)      # double-buffered output tile
        + 4 * lane_pad(tm, hidden, 4)      # f32 intermediates in the body
        + 2 * (weight_bytes + bias_bytes + 3 * 128 * 4)
        + (8 << 20))                       # headroom
    vmem_bytes = min(vmem_bytes, 48 << 20)  # safe on v7x (64 MiB per TC)

    flops = 2 * m * (x_dim * hidden + hidden * hidden + hidden * z_dim)
    bytes_accessed = (m * x_dim * it + m * z_dim * it
                      + weight_bytes + bias_bytes)

    out = pl.pallas_call(
        _zdecoder_kernel,
        out_shape=jax.ShapeDtypeStruct((m, z_dim), x.dtype),
        grid=grid,
        in_specs=[
            pl.BlockSpec((tm, x_dim), lambda i: (i, 0)),
            resident(w1.shape), resident((1, hidden)),
            resident(w2.shape), resident((1, hidden)),
            resident(w3.shape), resident((1, z_dim)),
        ],
        out_specs=pl.BlockSpec((tm, z_dim), lambda i: (i, 0)),
        compiler_params=pltpu.CompilerParams(
            dimension_semantics=("parallel",),
            vmem_limit_bytes=vmem_bytes),
        cost_estimate=pl.CostEstimate(flops=flops, transcendentals=0,
                                      bytes_accessed=bytes_accessed),
    )(x2, w1, b1r, w2, b2r, w3, b3r)

    return out.reshape(*lead, z_dim)


def init_zdecoder_params(key, x_dim, z_dim, hidden_dim=None,
                         dtype=jnp.float32):
    """Init matching nn.Linear default U(-1/sqrt(fan_in), 1/sqrt(fan_in)).

    Weights are stored in PyTorch (out_features, in_features) layout, exactly
    what the trans_b dot_general in the kernel consumes.
    """
    hidden_dim = hidden_dim if hidden_dim is not None else 2 * x_dim
    keys = jax.random.split(key, 6)

    def linear(kw, kb, fan_in, fan_out):
        bound = 1.0 / (fan_in ** 0.5)
        w = jax.random.uniform(kw, (fan_out, fan_in), dtype, -bound, bound)
        b = jax.random.uniform(kb, (fan_out,), dtype, -bound, bound)
        return w, b

    w1, b1 = linear(keys[0], keys[1], x_dim, hidden_dim)
    w2, b2 = linear(keys[2], keys[3], hidden_dim, hidden_dim)
    w3, b3 = linear(keys[4], keys[5], hidden_dim, z_dim)
    return (w1, b1, w2, b2, w3, b3)


def _reference_forward(x, params):
    w1, b1, w2, b2, w3, b3 = params
    h = jax.nn.relu(x @ w1.T + b1)
    h = jax.nn.relu(h @ w2.T + b2)
    return h @ w3.T + b3


if __name__ == "__main__":
    key = jax.random.PRNGKey(0)
    k_param, k_x = jax.random.split(key)

    batch, seq = 2, 8
    x_dim, z_dim = 16, 8
    hidden_dim = 2 * x_dim  # module default

    params = init_zdecoder_params(k_param, x_dim, z_dim, hidden_dim)
    x = jax.random.normal(k_x, (batch, seq, x_dim), dtype=jnp.float32)

    out = zdecoder_forward(x, params)
    out = jax.block_until_ready(out)

    ref = _reference_forward(x, params)
    assert out.shape == (batch, seq, z_dim), out.shape
    assert jnp.allclose(out, ref, atol=1e-4, rtol=1e-4), "mismatch vs reference"

    print("KERNEL_OK")
</pallas_src>

<mosaic_0001>
module attributes {stable_mosaic.version = 11 : i64} {
  func.func @_zdecoder_kernel(%arg0: i32, %arg1: memref<128x16xf32, #tpu.memory_space<vmem>>, %arg2: memref<32x16xf32, #tpu.memory_space<vmem>>, %arg3: memref<1x32xf32, #tpu.memory_space<vmem>>, %arg4: memref<32x32xf32, #tpu.memory_space<vmem>>, %arg5: memref<1x32xf32, #tpu.memory_space<vmem>>, %arg6: memref<8x32xf32, #tpu.memory_space<vmem>>, %arg7: memref<1x8xf32, #tpu.memory_space<vmem>>, %arg8: memref<128x8xf32, #tpu.memory_space<vmem>>) attributes {dimension_semantics = [#tpu.dimension_semantics<parallel>], iteration_bounds = array<i64: 1>, scalar_prefetch = 0 : i64, scratch_operands = 0 : i64, tpu.core_type = #tpu.core_type<tc>, window_params = [{transform_indices = @transform_0, window_bounds = array<i64: 128, 16>}, {pipeline_mode = #tpu.pipeline_mode<synchronous>, transform_indices = @transform_1, window_bounds = array<i64: 32, 16>}, {pipeline_mode = #tpu.pipeline_mode<synchronous>, transform_indices = @transform_2, window_bounds = array<i64: 1, 32>}, {pipeline_mode = #tpu.pipeline_mode<synchronous>, transform_indices = @transform_3, window_bounds = array<i64: 32, 32>}, {pipeline_mode = #tpu.pipeline_mode<synchronous>, transform_indices = @transform_4, window_bounds = array<i64: 1, 32>}, {pipeline_mode = #tpu.pipeline_mode<synchronous>, transform_indices = @transform_5, window_bounds = array<i64: 8, 32>}, {pipeline_mode = #tpu.pipeline_mode<synchronous>, transform_indices = @transform_6, window_bounds = array<i64: 1, 8>}, {transform_indices = @transform_7, window_bounds = array<i64: 128, 8>}]} {
    %c0 = arith.constant 0 : index
    %c0_0 = arith.constant 0 : index
    %0 = vector.load %arg1[%c0, %c0_0] : memref<128x16xf32, #tpu.memory_space<vmem>>, vector<128x16xf32>
    %c0_1 = arith.constant 0 : index
    %c0_2 = arith.constant 0 : index
    %1 = vector.load %arg2[%c0_1, %c0_2] : memref<32x16xf32, #tpu.memory_space<vmem>>, vector<32x16xf32>
    %cst = arith.constant dense<0.000000e+00> : vector<128x32xf32>
    %2 = tpu.matmul %0, %1, %cst {dimension_numbers = #tpu.dot_dimension_numbers<[1], [1], [0], [0], [0, 0, 1, 0], [], []>} : vector<128x16xf32>, vector<32x16xf32>, vector<128x32xf32> -> vector<128x32xf32>
    %c0_3 = arith.constant 0 : index
    %c0_4 = arith.constant 0 : index
    %3 = vector.load %arg3[%c0_3, %c0_4] : memref<1x32xf32, #tpu.memory_space<vmem>>, vector<1x32xf32>
    %4 = vector.broadcast %3 : vector<1x32xf32> to vector<128x32xf32>
    %5 = arith.addf %2, %4 : vector<128x32xf32>
    %cst_5 = arith.constant 0.000000e+00 : f32
    %6 = vector.broadcast %cst_5 : f32 to vector<128x32xf32>
    %7 = arith.maximumf %5, %6 : vector<128x32xf32>
    %c0_6 = arith.constant 0 : index
    %c0_7 = arith.constant 0 : index
    %8 = vector.load %arg4[%c0_6, %c0_7] : memref<32x32xf32, #tpu.memory_space<vmem>>, vector<32x32xf32>
    %cst_8 = arith.constant dense<0.000000e+00> : vector<128x32xf32>
    %9 = tpu.matmul %7, %8, %cst_8 {dimension_numbers = #tpu.dot_dimension_numbers<[1], [1], [0], [0], [0, 0, 1, 0], [], []>} : vector<128x32xf32>, vector<32x32xf32>, vector<128x32xf32> -> vector<128x32xf32>
    %c0_9 = arith.constant 0 : index
    %c0_10 = arith.constant 0 : index
    %10 = vector.load %arg5[%c0_9, %c0_10] : memref<1x32xf32, #tpu.memory_space<vmem>>, vector<1x32xf32>
    %11 = vector.broadcast %10 : vector<1x32xf32> to vector<128x32xf32>
    %12 = arith.addf %9, %11 : vector<128x32xf32>
    %cst_11 = arith.constant 0.000000e+00 : f32
    %13 = vector.broadcast %cst_11 : f32 to vector<128x32xf32>
    %14 = arith.maximumf %12, %13 : vector<128x32xf32>
    %c0_12 = arith.constant 0 : index
    %c0_13 = arith.constant 0 : index
    %15 = vector.load %arg6[%c0_12, %c0_13] : memref<8x32xf32, #tpu.memory_space<vmem>>, vector<8x32xf32>
    %cst_14 = arith.constant dense<0.000000e+00> : vector<128x8xf32>
    %16 = tpu.matmul %14, %15, %cst_14 {dimension_numbers = #tpu.dot_dimension_numbers<[1], [1], [0], [0], [0, 0, 1, 0], [], []>} : vector<128x32xf32>, vector<8x32xf32>, vector<128x8xf32> -> vector<128x8xf32>
    %c0_15 = arith.constant 0 : index
    %c0_16 = arith.constant 0 : index
    %17 = vector.load %arg7[%c0_15, %c0_16] : memref<1x8xf32, #tpu.memory_space<vmem>>, vector<1x8xf32>
    %18 = vector.broadcast %17 : vector<1x8xf32> to vector<128x8xf32>
    %19 = arith.addf %16, %18 : vector<128x8xf32>
    %c0_17 = arith.constant 0 : index
    %c0_18 = arith.constant 0 : index
    %20 = vector.load %arg8[%c0_17, %c0_18] : memref<128x8xf32, #tpu.memory_space<vmem>>, vector<128x8xf32>
    tpu.vector_store %arg8[%c0_17, %c0_18], %19 {strides = array<i32>} : memref<128x8xf32, #tpu.memory_space<vmem>>, vector<128x8xf32>,
    return
  }
  func.func @transform_0(%arg0: i32) -> (i32, i32) {
    %c0_i32 = arith.constant 0 : i32
    %c0_i32_0 = arith.constant 0 : i32
    return %arg0, %c0_i32 : i32, i32
  }
  func.func @transform_1(%arg0: i32) -> (i32, i32) {
    %c0_i32 = arith.constant 0 : i32
    %c0_i32_0 = arith.constant 0 : i32
    %c0_i32_1 = arith.constant 0 : i32
    return %c0_i32, %c0_i32_0 : i32, i32
  }
  func.func @transform_2(%arg0: i32) -> (i32, i32) {
    %c0_i32 = arith.constant 0 : i32
    %c0_i32_0 = arith.constant 0 : i32
    %c0_i32_1 = arith.constant 0 : i32
    return %c0_i32, %c0_i32_0 : i32, i32
  }
  func.func @transform_3(%arg0: i32) -> (i32, i32) {
    %c0_i32 = arith.constant 0 : i32
    %c0_i32_0 = arith.constant 0 : i32
    %c0_i32_1 = arith.constant 0 : i32
    return %c0_i32, %c0_i32_0 : i32, i32
  }
  func.func @transform_4(%arg0: i32) -> (i32, i32) {
    %c0_i32 = arith.constant 0 : i32
    %c0_i32_0 = arith.constant 0 : i32
    %c0_i32_1 = arith.constant 0 : i32
    return %c0_i32, %c0_i32_0 : i32, i32
  }
  func.func @transform_5(%arg0: i32) -> (i32, i32) {
    %c0_i32 = arith.constant 0 : i32
    %c0_i32_0 = arith.constant 0 : i32
    %c0_i32_1 = arith.constant 0 : i32
    return %c0_i32, %c0_i32_0 : i32, i32
  }
  func.func @transform_6(%arg0: i32) -> (i32, i32) {
    %c0_i32 = arith.constant 0 : i32
    %c0_i32_0 = arith.constant 0 : i32
    %c0_i32_1 = arith.constant 0 : i32
    return %c0_i32, %c0_i32_0 : i32, i32
  }
  func.func @transform_7(%arg0: i32) -> (i32, i32) {
    %c0_i32 = arith.constant 0 : i32
    %c0_i32_0 = arith.constant 0 : i32
    return %arg0, %c0_i32 : i32, i32
  }
}

</mosaic_0001>

<llo_original>
// kernel: zdecoder_forward.1
$region0: #{zdecoder_forward.1}
  #allocation0 [shape = 'u32[]', space=smem, size = 0x4, offset = 0x4, fixed_abs, tag = 'smem constant byte address 0x4 - core index']
  #allocation1 [shape = 'u32[144,128]{1,0:T(1,128)}', space=vmem, size = 0x12000, scoped, tag = 'internal scratch']
  %s0 = inlined_call_operand.vmem [shape: f32[16,16], index: 0, kind: input, shape index: {}]
  %s1 = inlined_call_operand.vmem [shape: f32[32,16], index: 1, kind: input, shape index: {}]
  %s2 = inlined_call_operand.vmem [shape: f32[1,32], index: 2, kind: input, shape index: {}]
  %s3 = inlined_call_operand.vmem [shape: f32[32,32], index: 3, kind: input, shape index: {}]
  %s4 = inlined_call_operand.vmem [shape: f32[1,32], index: 4, kind: input, shape index: {}]
  %s5 = inlined_call_operand.vmem [shape: f32[8,32], index: 5, kind: input, shape index: {}]
  %s6 = inlined_call_operand.vmem [shape: f32[1,8], index: 6, kind: input, shape index: {}]
  %s7 = inlined_call_operand.hbm [shape: f32[16,8], index: 7, kind: output, shape index: {}]
  %s8 = sld [smem:[#allocation0]]
  $region38: #{zdecoder_forward.1} parent=0
    _
  %s10 = ssub.s32 1, %s8
  %s11 = scalar_select 0, %s10, %s8
  $region1: #{zdecoder_forward.1} parent=0
    #allocation2 [shape = 'u8[65536]{0}', space=vmem, size = 0x10000, scoped, tag = 'output window, operand 0, single buffered']
    #allocation3 [shape = 's32[1]{0}', space=sflag, size = 0x4, scoped, tag = 'scoped memory for zdecoder_forward.1']
    %12 = vsyncpa [#allocation3], 0
    // Predicated region
    $region2: #{zdecoder_forward.1} parent=1 // pred_check
      _
    $region3: #{zdecoder_forward.1} parent=1 // pred_check_branch
      %14 = sbr.rel (0) target = $region5
    $region4: #{zdecoder_forward.1} parent=1 // pred_region
      _
    $region5: #{zdecoder_forward.1} parent=1 // pred_fallthru
      _
    // Predicated region
    $region6: #{zdecoder_forward.1} parent=1 // pred_check
      _
    $region7: #{zdecoder_forward.1} parent=1 // pred_check_branch
      %16 = sbr.rel (0) target = $region9
    $region8: #{zdecoder_forward.1} parent=1 // pred_region
      _
    $region9: #{zdecoder_forward.1} parent=1 // pred_fallthru
      _
    // Predicated region
    $region10: #{zdecoder_forward.1} parent=1 // pred_check
      _
    $region11: #{zdecoder_forward.1} parent=1 // pred_check_branch
      %18 = sbr.rel (0) target = $region13
    $region12: #{zdecoder_forward.1} parent=1 // pred_region
      _
    $region13: #{zdecoder_forward.1} parent=1 // pred_fallthru
      _
    // Predicated region
    $region14: #{zdecoder_forward.1} parent=1 // pred_check
      _
    $region15: #{zdecoder_forward.1} parent=1 // pred_check_branch
      %20 = sbr.rel (0) target = $region17
    $region16: #{zdecoder_forward.1} parent=1 // pred_region
      _
    $region17: #{zdecoder_forward.1} parent=1 // pred_fallthru
      _
    // Predicated region
    $region18: #{zdecoder_forward.1} parent=1 // pred_check
      _
    $region19: #{zdecoder_forward.1} parent=1 // pred_check_branch
      %22 = sbr.rel (0) target = $region21
    $region20: #{zdecoder_forward.1} parent=1 // pred_region
      _
    $region21: #{zdecoder_forward.1} parent=1 // pred_fallthru
      _
    // Predicated region
    $region22: #{zdecoder_forward.1} parent=1 // pred_check
      _
    $region23: #{zdecoder_forward.1} parent=1 // pred_check_branch
      %24 = sbr.rel (0) target = $region25
    $region24: #{zdecoder_forward.1} parent=1 // pred_region
      _
    $region25: #{zdecoder_forward.1} parent=1 // pred_fallthru
      _
    // Predicated region
    $region26: #{zdecoder_forward.1} parent=1 // pred_check
      _
    $region27: #{zdecoder_forward.1} parent=1 // pred_check_branch
      %26 = sbr.rel (0) target = $region29
    $region28: #{zdecoder_forward.1} parent=1 // pred_region
      _
    $region29: #{zdecoder_forward.1} parent=1 // pred_fallthru
      _
    %v27 = vld [vmem:[%s0] sm:$0xff]
    %v28 = vld [vmem:[%s0 + $0x8] sm:$0xff]
    %v29 = vld [vmem:[%s0 + $0x10] sm:$0xff]
    %v30 = vld [vmem:[%s0 + $0x18] sm:$0xff]
    %v31 = vld [vmem:[%s0 + $0x20] sm:$0xff]
    %v32 = vld [vmem:[%s0 + $0x28] sm:$0xff]
    %v33 = vld [vmem:[%s0 + $0x30] sm:$0xff]
    %v34 = vld [vmem:[%s0 + $0x38] sm:$0xff]
    %v35 = vld [vmem:[%s0 + $0x40] sm:$0xff]
    %v36 = vld [vmem:[%s0 + $0x48] sm:$0xff]
    %v37 = vld [vmem:[%s0 + $0x50] sm:$0xff]
    %v38 = vld [vmem:[%s0 + $0x58] sm:$0xff]
    %v39 = vld [vmem:[%s0 + $0x60] sm:$0xff]
    %v40 = vld [vmem:[%s0 + $0x68] sm:$0xff]
    %v41 = vld [vmem:[%s0 + $0x70] sm:$0xff]
    %v42 = vld [vmem:[%s0 + $0x78] sm:$0xff]
    %v43 = vld [vmem:[%s1] sm:$0xff]
    %v44 = vld [vmem:[%s1 + $0x8] sm:$0xff]
    %v45 = vld [vmem:[%s1 + $0x10] sm:$0xff]
    %v46 = vld [vmem:[%s1 + $0x18] sm:$0xff]
    %v47 = vld [vmem:[%s2] sm:$0x1]
    %v49 = vlaneseq
    %v50 = vshrl.u32 %v49, 7
    %v51 = vsub.s32 0, %v50
    %v52 = vrot.slane %v47, %v51
    %vm54 = vcmask 130048
    %v56 = vsel %vm54, %v27, 0
    %v59 = vsel %vm54, %v28, 0
    %v62 = vsel %vm54, %v29, 0
    %v65 = vsel %vm54, %v30, 0
    %v68 = vsel %vm54, %v31, 0
    %v71 = vsel %vm54, %v32, 0
    %v74 = vsel %vm54, %v33, 0
    %v77 = vsel %vm54, %v34, 0
    %v80 = vsel %vm54, %v35, 0
    %v83 = vsel %vm54, %v36, 0
    %v86 = vsel %vm54, %v37, 0
    %v89 = vsel %vm54, %v38, 0
    %v92 = vsel %vm54, %v39, 0
    %v95 = vsel %vm54, %v40, 0
    %v98 = vsel %vm54, %v41, 0
    %v101 = vsel %vm54, %v42, 0
    %v104 = vsel %vm54, %v43, 0
    %v107 = vsel %vm54, %v44, 0
    %v110 = vsel %vm54, %v45, 0
    %v113 = vsel %vm54, %v46, 0
    %115 = vmatprep.subr.mxu0 0.0
    %116 = vmatpush1.xpose.msra.mxu0 0.0
    %117 = vmatprep.subr.mxu0 0.0
    %118 = vmatpush1.xpose.msra.mxu0 0.0
    %119 = vmatprep.subr.mxu0 0.0
    %120 = vmatpush1.xpose.msra.mxu0 0.0
    %121 = vmatprep.subr.mxu0 0.0
    %122 = vmatpush1.xpose.msra.mxu0 0.0
    %123 = vmatprep.subr.mxu0 0.0
    %124 = vmatpush1.xpose.msra.mxu0 0.0
    %125 = vmatprep.subr.mxu0 0.0
    %126 = vmatpush1.xpose.msra.mxu0 0.0
    %127 = vmatprep.subr.mxu0 0.0
    %128 = vmatpush1.xpose.msra.mxu0 0.0
    %129 = vmatprep.subr.mxu0 0.0
    %130 = vmatpush1.xpose.msra.mxu0 0.0
    %131 = vmatprep.subr.mxu0 0.0
    %132 = vmatpush1.xpose.msra.mxu0 0.0
    %133 = vmatprep.subr.mxu0 0.0
    %134 = vmatpush1.xpose.msra.mxu0 0.0
    %135 = vmatprep.subr.mxu0 0.0
    %136 = vmatpush1.xpose.msra.mxu0 0.0
    %137 = vmatprep.subr.mxu0 0.0
    %138 = vmatpush1.xpose.msra.mxu0 0.0
    %139 = vmatprep.subr.mxu0 0.0
    %140 = vmatpush1.xpose.msra.mxu0 %v113
    %141 = vmatprep.subr.mxu0 0.0
    %142 = vmatpush1.xpose.msra.mxu0 %v110
    %143 = vmatprep.subr.mxu0 0.0
    %144 = vmatpush1.xpose.msra.mxu0 %v107
    %145 = vmatprep.subr.mxu0 0.0
    %146 = vmatpush1.xpose.msra.mxu0 %v104
    %147 = vmatprep.subr.mxu0 0.0
    %148 = vmatpush2.xpose.msra.mxu0 0.0
    %149 = vmatprep.subr.mxu0 0.0
    %150 = vmatpush2.xpose.msra.mxu0 0.0
    %151 = vmatprep.subr.mxu0 0.0
    %152 = vmatpush2.xpose.msra.mxu0 0.0
    %153 = vmatprep.subr.mxu0 0.0
    %154 = vmatpush2.xpose.msra.mxu0 0.0
    %155 = vmatprep.subr.mxu0 0.0
    %156 = vmatpush2.xpose.msra.mxu0 0.0
    %157 = vmatprep.subr.mxu0 0.0
    %158 = vmatpush2.xpose.msra.mxu0 0.0
    %159 = vmatprep.subr.mxu0 0.0
    %160 = vmatpush2.xpose.msra.mxu0 0.0
    %161 = vmatprep.subr.mxu0 0.0
    %162 = vmatpush2.xpose.msra.mxu0 0.0
    %163 = vmatprep.subr.mxu0 0.0
    %164 = vmatpush2.xpose.msra.mxu0 0.0
    %165 = vmatprep.subr.mxu0 0.0
    %166 = vmatpush2.xpose.msra.mxu0 0.0
    %167 = vmatprep.subr.mxu0 0.0
    %168 = vmatpush2.xpose.msra.mxu0 0.0
    %169 = vmatprep.subr.mxu0 0.0
    %170 = vmatpush2.xpose.msra.mxu0 0.0
    %171 = vmatprep.subr.mxu0 0.0
    %172 = vmatpush2.xpose.msra.mxu0 0.0
    %173 = vmatprep.subr.mxu0 0.0
    %174 = vmatpush2.xpose.msra.mxu0 0.0
    %175 = vmatprep.subr.mxu0 0.0
    %176 = vmatpush2.xpose.msra.mxu0 0.0
    %177 = vmatprep.subr.mxu0 0.0
    %178 = vmatpush2.xpose.msra.mxu0 0.0
    %179 = vmatprep.mubr.f32.mxu0 0.0
    %180 = vmatmul.mubr.f32.gmra.mxu0 %v56
    %v181 = vpop.f32.mrf.mxu0
    %v182 = vadd.f32 %v52, %v181
    %v183 = vpop.f32.mrf.mxu0
    %184 = vmatprep.mubr.f32.mxu0 0.0
    %185 = vmatmul.mubr.f32.gmra.mxu0 %v59
    %v186 = vpop.f32.mrf.mxu0
    %v187 = vadd.f32 %v52, %v186
    %v188 = vpop.f32.mrf.mxu0
    %189 = vmatprep.mubr.f32.mxu0 0.0
    %190 = vmatmul.mubr.f32.gmra.mxu0 %v62
    %v191 = vpop.f32.mrf.mxu0
    %v192 = vadd.f32 %v52, %v191
    %v193 = vpop.f32.mrf.mxu0
    %194 = vmatprep.mubr.f32.mxu0 0.0
    %195 = vmatmul.mubr.f32.gmra.mxu0 %v65
    %v196 = vpop.f32.mrf.mxu0
    %v197 = vadd.f32 %v52, %v196
    %v198 = vpop.f32.mrf.mxu0
    %199 = vmatprep.mubr.f32.mxu0 0.0
    %200 = vmatmul.mubr.f32.gmra.mxu0 %v68
    %v201 = vpop.f32.mrf.mxu0
    %v202 = vadd.f32 %v52, %v201
    %v203 = vpop.f32.mrf.mxu0
    %204 = vmatprep.mubr.f32.mxu0 0.0
    %205 = vmatmul.mubr.f32.gmra.mxu0 %v71
    %v206 = vpop.f32.mrf.mxu0
    %v207 = vadd.f32 %v52, %v206
    %v208 = vpop.f32.mrf.mxu0
    %209 = vmatprep.mubr.f32.mxu0 0.0
    %210 = vmatmul.mubr.f32.gmra.mxu0 %v74
    %v211 = vpop.f32.mrf.mxu0
    %v212 = vadd.f32 %v52, %v211
    %v213 = vpop.f32.mrf.mxu0
    %214 = vmatprep.mubr.f32.mxu0 0.0
    %215 = vmatmul.mubr.f32.gmra.mxu0 %v77
    %v216 = vpop.f32.mrf.mxu0
    %v217 = vadd.f32 %v52, %v216
    %v218 = vpop.f32.mrf.mxu0
    %219 = vmatprep.mubr.f32.mxu0 0.0
    %220 = vmatmul.mubr.f32.gmra.mxu0 %v80
    %v221 = vpop.f32.mrf.mxu0
    %v222 = vadd.f32 %v52, %v221
    %v223 = vpop.f32.mrf.mxu0
    %224 = vmatprep.mubr.f32.mxu0 0.0
    %225 = vmatmul.mubr.f32.gmra.mxu0 %v83
    %v226 = vpop.f32.mrf.mxu0
    %v227 = vadd.f32 %v52, %v226
    %v228 = vpop.f32.mrf.mxu0
    %229 = vmatprep.mubr.f32.mxu0 0.0
    %230 = vmatmul.mubr.f32.gmra.mxu0 %v86
    %v231 = vpop.f32.mrf.mxu0
    %v232 = vadd.f32 %v52, %v231
    %v233 = vpop.f32.mrf.mxu0
    %234 = vmatprep.mubr.f32.mxu0 0.0
    %235 = vmatmul.mubr.f32.gmra.mxu0 %v89
    %v236 = vpop.f32.mrf.mxu0
    %v237 = vadd.f32 %v52, %v236
    %v238 = vpop.f32.mrf.mxu0
    %239 = vmatprep.mubr.f32.mxu0 0.0
    %240 = vmatmul.mubr.f32.gmra.mxu0 %v92
    %v241 = vpop.f32.mrf.mxu0
    %v242 = vadd.f32 %v52, %v241
    %v243 = vpop.f32.mrf.mxu0
    %244 = vmatprep.mubr.f32.mxu0 0.0
    %245 = vmatmul.mubr.f32.gmra.mxu0 %v95
    %v246 = vpop.f32.mrf.mxu0
    %v247 = vadd.f32 %v52, %v246
    %v248 = vpop.f32.mrf.mxu0
    %249 = vmatprep.mubr.f32.mxu0 0.0
    %250 = vmatmul.mubr.f32.gmra.mxu0 %v98
    %v251 = vpop.f32.mrf.mxu0
    %v252 = vadd.f32 %v52, %v251
    %v253 = vpop.f32.mrf.mxu0
    %254 = vmatprep.mubr.f32.mxu0 0.0
    %255 = vmatmul.mubr.f32.gmra.mxu0 %v101
    %v256 = vpop.f32.mrf.mxu0
    %v257 = vadd.f32 %v52, %v256
    %v258 = vpop.f32.mrf.mxu0
    %259 = vdwg.mxu0
    %v260 = vmax.f32 %v182, 0.0
    %v261 = vmax.f32 %v187, 0.0
    %v262 = vmax.f32 %v192, 0.0
    %v263 = vmax.f32 %v197, 0.0
    %v264 = vmax.f32 %v202, 0.0
    %v265 = vmax.f32 %v207, 0.0
    %v266 = vmax.f32 %v212, 0.0
    %v267 = vmax.f32 %v217, 0.0
    %v268 = vmax.f32 %v222, 0.0
    %v269 = vmax.f32 %v227, 0.0
    %v270 = vmax.f32 %v232, 0.0
    %v271 = vmax.f32 %v237, 0.0
    %v272 = vmax.f32 %v242, 0.0
    %v273 = vmax.f32 %v247, 0.0
    %v274 = vmax.f32 %v252, 0.0
    %v275 = vmax.f32 %v257, 0.0
    %v276 = vld [vmem:[%s3] sm:$0xff]
    %v277 = vld [vmem:[%s3 + $0x8] sm:$0xff]
    %v278 = vld [vmem:[%s3 + $0x10] sm:$0xff]
    %v279 = vld [vmem:[%s3 + $0x18] sm:$0xff]
    %v280 = vld [vmem:[%s4] sm:$0x1]
    %v282 = vlaneseq
    %v283 = vshrl.u32 %v282, 7
    %v284 = vsub.s32 0, %v283
    %v285 = vrot.slane %v280, %v284
    %vm287 = vcmask 261120
    %v289 = vsel %vm287, %v260, 0
    %v292 = vsel %vm287, %v261, 0
    %v295 = vsel %vm287, %v262, 0
    %v298 = vsel %vm287, %v263, 0
    %v301 = vsel %vm287, %v264, 0
    %v304 = vsel %vm287, %v265, 0
    %v307 = vsel %vm287, %v266, 0
    %v310 = vsel %vm287, %v267, 0
    %v313 = vsel %vm287, %v268, 0
    %v316 = vsel %vm287, %v269, 0
    %v319 = vsel %vm287, %v270, 0
    %v322 = vsel %vm287, %v271, 0
    %v325 = vsel %vm287, %v272, 0
    %v328 = vsel %vm287, %v273, 0
    %v331 = vsel %vm287, %v274, 0
    %v334 = vsel %vm287, %v275, 0
    %v337 = vsel %vm287, %v276, 0
    %v340 = vsel %vm287, %v277, 0
    %v343 = vsel %vm287, %v278, 0
    %v346 = vsel %vm287, %v279, 0
    %348 = vmatprep.subr.mxu0 0.0
    %349 = vmatpush1.xpose.msra.mxu0 0.0
    %350 = vmatprep.subr.mxu0 0.0
    %351 = vmatpush1.xpose.msra.mxu0 0.0
    %352 = vmatprep.subr.mxu0 0.0
    %353 = vmatpush1.xpose.msra.mxu0 0.0
    %354 = vmatprep.subr.mxu0 0.0
    %355 = vmatpush1.xpose.msra.mxu0 0.0
    %356 = vmatprep.subr.mxu0 0.0
    %357 = vmatpush1.xpose.msra.mxu0 0.0
    %358 = vmatprep.subr.mxu0 0.0
    %359 = vmatpush1.xpose.msra.mxu0 0.0
    %360 = vmatprep.subr.mxu0 0.0
    %361 = vmatpush1.xpose.msra.mxu0 0.0
    %362 = vmatprep.subr.mxu0 0.0
    %363 = vmatpush1.xpose.msra.mxu0 0.0
    %364 = vmatprep.subr.mxu0 0.0
    %365 = vmatpush1.xpose.msra.mxu0 0.0
    %366 = vmatprep.subr.mxu0 0.0
    %367 = vmatpush1.xpose.msra.mxu0 0.0
    %368 = vmatprep.subr.mxu0 0.0
    %369 = vmatpush1.xpose.msra.mxu0 0.0
    %370 = vmatprep.subr.mxu0 0.0
    %371 = vmatpush1.xpose.msra.mxu0 0.0
    %372 = vmatprep.subr.mxu0 0.0
    %373 = vmatpush1.xpose.msra.mxu0 %v346
    %374 = vmatprep.subr.mxu0 0.0
    %375 = vmatpush1.xpose.msra.mxu0 %v343
    %376 = vmatprep.subr.mxu0 0.0
    %377 = vmatpush1.xpose.msra.mxu0 %v340
    %378 = vmatprep.subr.mxu0 0.0
    %379 = vmatpush1.xpose.msra.mxu0 %v337
    %380 = vmatprep.subr.mxu0 0.0
    %381 = vmatpush2.xpose.msra.mxu0 0.0
    %382 = vmatprep.subr.mxu0 0.0
    %383 = vmatpush2.xpose.msra.mxu0 0.0
    %384 = vmatprep.subr.mxu0 0.0
    %385 = vmatpush2.xpose.msra.mxu0 0.0
    %386 = vmatprep.subr.mxu0 0.0
    %387 = vmatpush2.xpose.msra.mxu0 0.0
    %388 = vmatprep.subr.mxu0 0.0
    %389 = vmatpush2.xpose.msra.mxu0 0.0
    %390 = vmatprep.subr.mxu0 0.0
    %391 = vmatpush2.xpose.msra.mxu0 0.0
    %392 = vmatprep.subr.mxu0 0.0
    %393 = vmatpush2.xpose.msra.mxu0 0.0
    %394 = vmatprep.subr.mxu0 0.0
    %395 = vmatpush2.xpose.msra.mxu0 0.0
    %396 = vmatprep.subr.mxu0 0.0
    %397 = vmatpush2.xpose.msra.mxu0 0.0
    %398 = vmatprep.subr.mxu0 0.0
    %399 = vmatpush2.xpose.msra.mxu0 0.0
    %400 = vmatprep.subr.mxu0 0.0
    %401 = vmatpush2.xpose.msra.mxu0 0.0
    %402 = vmatprep.subr.mxu0 0.0
    %403 = vmatpush2.xpose.msra.mxu0 0.0
    %404 = vmatprep.subr.mxu0 0.0
    %405 = vmatpush2.xpose.msra.mxu0 0.0
    %406 = vmatprep.subr.mxu0 0.0
    %407 = vmatpush2.xpose.msra.mxu0 0.0
    %408 = vmatprep.subr.mxu0 0.0
    %409 = vmatpush2.xpose.msra.mxu0 0.0
    %410 = vmatprep.subr.mxu0 0.0
    %411 = vmatpush2.xpose.msra.mxu0 0.0
    %412 = vmatprep.mubr.f32.mxu0 0.0
    %413 = vmatmul.mubr.f32.gmra.mxu0 %v289
    %v414 = vpop.f32.mrf.mxu0
    %v415 = vadd.f32 %v285, %v414
    %v416 = vpop.f32.mrf.mxu0
    %417 = vmatprep.mubr.f32.mxu0 0.0
    %418 = vmatmul.mubr.f32.gmra.mxu0 %v292
    %v419 = vpop.f32.mrf.mxu0
    %v420 = vadd.f32 %v285, %v419
    %v421 = vpop.f32.mrf.mxu0
    %422 = vmatprep.mubr.f32.mxu0 0.0
    %423 = vmatmul.mubr.f32.gmra.mxu0 %v295
    %v424 = vpop.f32.mrf.mxu0
    %v425 = vadd.f32 %v285, %v424
    %v426 = vpop.f32.mrf.mxu0
    %427 = vmatprep.mubr.f32.mxu0 0.0
    %428 = vmatmul.mubr.f32.gmra.mxu0 %v298
    %v429 = vpop.f32.mrf.mxu0
    %v430 = vadd.f32 %v285, %v429
    %v431 = vpop.f32.mrf.mxu0
    %432 = vmatprep.mubr.f32.mxu0 0.0
    %433 = vmatmul.mubr.f32.gmra.mxu0 %v301
    %v434 = vpop.f32.mrf.mxu0
    %v435 = vadd.f32 %v285, %v434
    %v436 = vpop.f32.mrf.mxu0
    %437 = vmatprep.mubr.f32.mxu0 0.0
    %438 = vmatmul.mubr.f32.gmra.mxu0 %v304
    %v439 = vpop.f32.mrf.mxu0
    %v440 = vadd.f32 %v285, %v439
    %v441 = vpop.f32.mrf.mxu0
    %442 = vmatprep.mubr.f32.mxu0 0.0
    %443 = vmatmul.mubr.f32.gmra.mxu0 %v307
    %v444 = vpop.f32.mrf.mxu0
    %v445 = vadd.f32 %v285, %v444
    %v446 = vpop.f32.mrf.mxu0
    %447 = vmatprep.mubr.f32.mxu0 0.0
    %448 = vmatmul.mubr.f32.gmra.mxu0 %v310
    %v449 = vpop.f32.mrf.mxu0
    %v450 = vadd.f32 %v285, %v449
    %v451 = vpop.f32.mrf.mxu0
    %452 = vmatprep.mubr.f32.mxu0 0.0
    %453 = vmatmul.mubr.f32.gmra.mxu0 %v313
    %v454 = vpop.f32.mrf.mxu0
    %v455 = vadd.f32 %v285, %v454
    %v456 = vpop.f32.mrf.mxu0
    %457 = vmatprep.mubr.f32.mxu0 0.0
    %458 = vmatmul.mubr.f32.gmra.mxu0 %v316
    %v459 = vpop.f32.mrf.mxu0
    %v460 = vadd.f32 %v285, %v459
    %v461 = vpop.f32.mrf.mxu0
    %462 = vmatprep.mubr.f32.mxu0 0.0
    %463 = vmatmul.mubr.f32.gmra.mxu0 %v319
    %v464 = vpop.f32.mrf.mxu0
    %v465 = vadd.f32 %v285, %v464
    %v466 = vpop.f32.mrf.mxu0
    %467 = vmatprep.mubr.f32.mxu0 0.0
    %468 = vmatmul.mubr.f32.gmra.mxu0 %v322
    %v469 = vpop.f32.mrf.mxu0
    %v470 = vadd.f32 %v285, %v469
    %v471 = vpop.f32.mrf.mxu0
    %472 = vmatprep.mubr.f32.mxu0 0.0
    %473 = vmatmul.mubr.f32.gmra.mxu0 %v325
    %v474 = vpop.f32.mrf.mxu0
    %v475 = vadd.f32 %v285, %v474
    %v476 = vpop.f32.mrf.mxu0
    %477 = vmatprep.mubr.f32.mxu0 0.0
    %478 = vmatmul.mubr.f32.gmra.mxu0 %v328
    %v479 = vpop.f32.mrf.mxu0
    %v480 = vadd.f32 %v285, %v479
    %v481 = vpop.f32.mrf.mxu0
    %482 = vmatprep.mubr.f32.mxu0 0.0
    %483 = vmatmul.mubr.f32.gmra.mxu0 %v331
    %v484 = vpop.f32.mrf.mxu0
    %v485 = vadd.f32 %v285, %v484
    %v486 = vpop.f32.mrf.mxu0
    %487 = vmatprep.mubr.f32.mxu0 0.0
    %488 = vmatmul.mubr.f32.gmra.mxu0 %v334
    %v489 = vpop.f32.mrf.mxu0
    %v490 = vadd.f32 %v285, %v489
    %v491 = vpop.f32.mrf.mxu0
    %492 = vdwg.mxu0
    %v493 = vmax.f32 %v415, 0.0
    %v494 = vmax.f32 %v420, 0.0
    %v495 = vmax.f32 %v425, 0.0
    %v496 = vmax.f32 %v430, 0.0
    %v497 = vmax.f32 %v435, 0.0
    %v498 = vmax.f32 %v440, 0.0
    %v499 = vmax.f32 %v445, 0.0
    %v500 = vmax.f32 %v450, 0.0
    %v501 = vmax.f32 %v455, 0.0
    %v502 = vmax.f32 %v460, 0.0
    %v503 = vmax.f32 %v465, 0.0
    %v504 = vmax.f32 %v470, 0.0
    %v505 = vmax.f32 %v475, 0.0
    %v506 = vmax.f32 %v480, 0.0
    %v507 = vmax.f32 %v485, 0.0
    %v508 = vmax.f32 %v490, 0.0
    %v509 = vld [vmem:[%s5] sm:$0xff]
    %v510 = vld [vmem:[%s6] sm:$0x1]
    %v512 = vlaneseq
    %v513 = vshrl.u32 %v512, 7
    %v514 = vsub.s32 0, %v513
    %v515 = vrot.slane %v510, %v514
    %v518 = vsel %vm287, %v493, 0
    %v521 = vsel %vm287, %v494, 0
    %v524 = vsel %vm287, %v495, 0
    %v527 = vsel %vm287, %v496, 0
    %v530 = vsel %vm287, %v497, 0
    %v533 = vsel %vm287, %v498, 0
    %v536 = vsel %vm287, %v499, 0
    %v539 = vsel %vm287, %v500, 0
    %v542 = vsel %vm287, %v501, 0
    %v545 = vsel %vm287, %v502, 0
    %v548 = vsel %vm287, %v503, 0
    %v551 = vsel %vm287, %v504, 0
    %v554 = vsel %vm287, %v505, 0
    %v557 = vsel %vm287, %v506, 0
    %v560 = vsel %vm287, %v507, 0
    %v563 = vsel %vm287, %v508, 0
    %v566 = vsel %vm287, %v509, 0
    %568 = vmatprep.subr.mxu0 0.0
    %569 = vmatpush1.xpose.msra.mxu0 0.0
    %570 = vmatprep.subr.mxu0 0.0
    %571 = vmatpush1.xpose.msra.mxu0 0.0
    %572 = vmatprep.subr.mxu0 0.0
    %573 = vmatpush1.xpose.msra.mxu0 0.0
    %574 = vmatprep.subr.mxu0 0.0
    %575 = vmatpush1.xpose.msra.mxu0 0.0
    %576 = vmatprep.subr.mxu0 0.0
    %577 = vmatpush1.xpose.msra.mxu0 0.0
    %578 = vmatprep.subr.mxu0 0.0
    %579 = vmatpush1.xpose.msra.mxu0 0.0
    %580 = vmatprep.subr.mxu0 0.0
    %581 = vmatpush1.xpose.msra.mxu0 0.0
    %582 = vmatprep.subr.mxu0 0.0
    %583 = vmatpush1.xpose.msra.mxu0 0.0
    %584 = vmatprep.subr.mxu0 0.0
    %585 = vmatpush1.xpose.msra.mxu0 0.0
    %586 = vmatprep.subr.mxu0 0.0
    %587 = vmatpush1.xpose.msra.mxu0 0.0
    %588 = vmatprep.subr.mxu0 0.0
    %589 = vmatpush1.xpose.msra.mxu0 0.0
    %590 = vmatprep.subr.mxu0 0.0
    %591 = vmatpush1.xpose.msra.mxu0 0.0
    %592 = vmatprep.subr.mxu0 0.0
    %593 = vmatpush1.xpose.msra.mxu0 0.0
    %594 = vmatprep.subr.mxu0 0.0
    %595 = vmatpush1.xpose.msra.mxu0 0.0
    %596 = vmatprep.subr.mxu0 0.0
    %597 = vmatpush1.xpose.msra.mxu0 0.0
    %598 = vmatprep.subr.mxu0 0.0
    %599 = vmatpush1.xpose.msra.mxu0 %v566
    %600 = vmatprep.subr.mxu0 0.0
    %601 = vmatpush2.xpose.msra.mxu0 0.0
    %602 = vmatprep.subr.mxu0 0.0
    %603 = vmatpush2.xpose.msra.mxu0 0.0
    %604 = vmatprep.subr.mxu0 0.0
    %605 = vmatpush2.xpose.msra.mxu0 0.0
    %606 = vmatprep.subr.mxu0 0.0
    %607 = vmatpush2.xpose.msra.mxu0 0.0
    %608 = vmatprep.subr.mxu0 0.0
    %609 = vmatpush2.xpose.msra.mxu0 0.0
    %610 = vmatprep.subr.mxu0 0.0
    %611 = vmatpush2.xpose.msra.mxu0 0.0
    %612 = vmatprep.subr.mxu0 0.0
    %613 = vmatpush2.xpose.msra.mxu0 0.0
    %614 = vmatprep.subr.mxu0 0.0
    %615 = vmatpush2.xpose.msra.mxu0 0.0
    %616 = vmatprep.subr.mxu0 0.0
    %617 = vmatpush2.xpose.msra.mxu0 0.0
    %618 = vmatprep.subr.mxu0 0.0
    %619 = vmatpush2.xpose.msra.mxu0 0.0
    %620 = vmatprep.subr.mxu0 0.0
    %621 = vmatpush2.xpose.msra.mxu0 0.0
    %622 = vmatprep.subr.mxu0 0.0
    %623 = vmatpush2.xpose.msra.mxu0 0.0
    %624 = vmatprep.subr.mxu0 0.0
    %625 = vmatpush2.xpose.msra.mxu0 0.0
    %626 = vmatprep.subr.mxu0 0.0
    %627 = vmatpush2.xpose.msra.mxu0 0.0
    %628 = vmatprep.subr.mxu0 0.0
    %629 = vmatpush2.xpose.msra.mxu0 0.0
    %630 = vmatprep.subr.mxu0 0.0
    %631 = vmatpush2.xpose.msra.mxu0 0.0
    %632 = vmatprep.mubr.f32.mxu0 0.0
    %633 = vmatmul.mubr.f32.gmra.mxu0 %v518
    %v634 = vpop.f32.mrf.mxu0
    %v635 = vadd.f32 %v515, %v634
    %v636 = vpop.f32.mrf.mxu0
    %637 = vmatprep.mubr.f32.mxu0 0.0
    %638 = vmatmul.mubr.f32.gmra.mxu0 %v521
    %v639 = vpop.f32.mrf.mxu0
    %v640 = vadd.f32 %v515, %v639
    %v641 = vpop.f32.mrf.mxu0
    %642 = vmatprep.mubr.f32.mxu0 0.0
    %643 = vmatmul.mubr.f32.gmra.mxu0 %v524
    %v644 = vpop.f32.mrf.mxu0
    %v645 = vadd.f32 %v515, %v644
    %v646 = vpop.f32.mrf.mxu0
    %647 = vmatprep.mubr.f32.mxu0 0.0
    %648 = vmatmul.mubr.f32.gmra.mxu0 %v527
    %v649 = vpop.f32.mrf.mxu0
    %v650 = vadd.f32 %v515, %v649
    %v651 = vpop.f32.mrf.mxu0
    %652 = vmatprep.mubr.f32.mxu0 0.0
    %653 = vmatmul.mubr.f32.gmra.mxu0 %v530
    %v654 = vpop.f32.mrf.mxu0
    %v655 = vadd.f32 %v515, %v654
    %v656 = vpop.f32.mrf.mxu0
    %657 = vmatprep.mubr.f32.mxu0 0.0
    %658 = vmatmul.mubr.f32.gmra.mxu0 %v533
    %v659 = vpop.f32.mrf.mxu0
    %v660 = vadd.f32 %v515, %v659
    %v661 = vpop.f32.mrf.mxu0
    %662 = vmatprep.mubr.f32.mxu0 0.0
    %663 = vmatmul.mubr.f32.gmra.mxu0 %v536
    %v664 = vpop.f32.mrf.mxu0
    %v665 = vadd.f32 %v515, %v664
    %v666 = vpop.f32.mrf.mxu0
    %667 = vmatprep.mubr.f32.mxu0 0.0
    %668 = vmatmul.mubr.f32.gmra.mxu0 %v539
    %v669 = vpop.f32.mrf.mxu0
    %v670 = vadd.f32 %v515, %v669
    %v671 = vpop.f32.mrf.mxu0
    %672 = vmatprep.mubr.f32.mxu0 0.0
    %673 = vmatmul.mubr.f32.gmra.mxu0 %v542
    %v674 = vpop.f32.mrf.mxu0
    %v675 = vadd.f32 %v515, %v674
    %v676 = vpop.f32.mrf.mxu0
    %677 = vmatprep.mubr.f32.mxu0 0.0
    %678 = vmatmul.mubr.f32.gmra.mxu0 %v545
    %v679 = vpop.f32.mrf.mxu0
    %v680 = vadd.f32 %v515, %v679
    %v681 = vpop.f32.mrf.mxu0
    %682 = vmatprep.mubr.f32.mxu0 0.0
    %683 = vmatmul.mubr.f32.gmra.mxu0 %v548
    %v684 = vpop.f32.mrf.mxu0
    %v685 = vadd.f32 %v515, %v684
    %v686 = vpop.f32.mrf.mxu0
    %687 = vmatprep.mubr.f32.mxu0 0.0
    %688 = vmatmul.mubr.f32.gmra.mxu0 %v551
    %v689 = vpop.f32.mrf.mxu0
    %v690 = vadd.f32 %v515, %v689
    %v691 = vpop.f32.mrf.mxu0
    %692 = vmatprep.mubr.f32.mxu0 0.0
    %693 = vmatmul.mubr.f32.gmra.mxu0 %v554
    %v694 = vpop.f32.mrf.mxu0
    %v695 = vadd.f32 %v515, %v694
    %v696 = vpop.f32.mrf.mxu0
    %697 = vmatprep.mubr.f32.mxu0 0.0
    %698 = vmatmul.mubr.f32.gmra.mxu0 %v557
    %v699 = vpop.f32.mrf.mxu0
    %v700 = vadd.f32 %v515, %v699
    %v701 = vpop.f32.mrf.mxu0
    %702 = vmatprep.mubr.f32.mxu0 0.0
    %703 = vmatmul.mubr.f32.gmra.mxu0 %v560
    %v704 = vpop.f32.mrf.mxu0
    %v705 = vadd.f32 %v515, %v704
    %v706 = vpop.f32.mrf.mxu0
    %707 = vmatprep.mubr.f32.mxu0 0.0
    %708 = vmatmul.mubr.f32.gmra.mxu0 %v563
    %v709 = vpop.f32.mrf.mxu0
    %v710 = vadd.f32 %v515, %v709
    %v711 = vpop.f32.mrf.mxu0
    %712 = vdwg.mxu0
    %vm713 = vcmask 64512
    %714 = vst.msk [vmem:[#allocation2] sm:$0xff] %vm713, %v635
    %715 = vst.msk [vmem:[#allocation2 + $0x8] sm:$0xff] %vm713, %v640
    %716 = vst.msk [vmem:[#allocation2 + $0x10] sm:$0xff] %vm713, %v645
    %717 = vst.msk [vmem:[#allocation2 + $0x18] sm:$0xff] %vm713, %v650
    %718 = vst.msk [vmem:[#allocation2 + $0x20] sm:$0xff] %vm713, %v655
    %719 = vst.msk [vmem:[#allocation2 + $0x28] sm:$0xff] %vm713, %v660
    %720 = vst.msk [vmem:[#allocation2 + $0x30] sm:$0xff] %vm713, %v665
    %721 = vst.msk [vmem:[#allocation2 + $0x38] sm:$0xff] %vm713, %v670
    %722 = vst.msk [vmem:[#allocation2 + $0x40] sm:$0xff] %vm713, %v675
    %723 = vst.msk [vmem:[#allocation2 + $0x48] sm:$0xff] %vm713, %v680
    %724 = vst.msk [vmem:[#allocation2 + $0x50] sm:$0xff] %vm713, %v685
    %725 = vst.msk [vmem:[#allocation2 + $0x58] sm:$0xff] %vm713, %v690
    %726 = vst.msk [vmem:[#allocation2 + $0x60] sm:$0xff] %vm713, %v695
    %727 = vst.msk [vmem:[#allocation2 + $0x68] sm:$0xff] %vm713, %v700
    %728 = vst.msk [vmem:[#allocation2 + $0x70] sm:$0xff] %vm713, %v705
    %729 = vst.msk [vmem:[#allocation2 + $0x78] sm:$0xff] %vm713, %v710
    // Predicated region
    $region30: #{zdecoder_forward.1} parent=1 // pred_check
      _
    $region31: #{zdecoder_forward.1} parent=1 // pred_check_branch
      %731 = sbr.rel (0) target = $region33
    $region32: #{zdecoder_forward.1} parent=1 // pred_region
      %s733 = ssub.s32 2048, 256
      %734 = vsyncadd [#allocation3], %s733
      %s735 = sshll.u32 [#allocation2], 4
      %s736 = int_to_ptr.vmem [resolvable:$true] %s735
      %741 = dma.vmem_to_hbm [thread:$0]  %s736, 256, %s7, [#allocation3], 128, 128, 8
    $region33: #{zdecoder_forward.1} parent=1 // pred_fallthru
      _
    // Predicated region
    $region34: #{zdecoder_forward.1} parent=1 // pred_check
      _
    $region35: #{zdecoder_forward.1} parent=1 // pred_check_branch
      %743 = sbr.rel (0) target = $region37
    $region36: #{zdecoder_forward.1} parent=1 // pred_region
      %744 = dma.done [#allocation3], 2048
    $region37: #{zdecoder_forward.1} parent=1 // pred_fallthru
      _
    %745 = vsyncpa [#allocation3], 1

</llo_original>
